<compile_context>
chip_gen: v7x
topology: tpu7x:2x2x1
jax: 0.10.0
libtpu: 0.0.40
codegen_flags: <defaults>
</compile_context>

<pallas_src>
import jax
import jax.numpy as jnp
from jax import lax
from jax.experimental import pallas as pl
from jax.experimental.pallas import tpu as pltpu


def _round_up(a, b):
    return ((a + b - 1) // b) * b


def _round_down(a, b):
    return (a // b) * b


def _make_partial_kernel(tm, tn, cw, M, L, need_row_mask, need_col_mask):
    """Builds the per-tile partial-sum kernel with statics closed over.

    x_ref, t_ref : (tm, tn) input tiles
    p_ref        : (tm, cw) f32 partial-sum block, resident across the lane
                   (reduction) grid axis.
    """
    n_chunks = tn // cw

    def kernel(x_ref, t_ref, p_ref):
        j = pl.program_id(1)

        @pl.when(j == 0)
        def _init():
            p_ref[...] = jnp.zeros_like(p_ref)

        if need_row_mask:
            i = pl.program_id(0)
            row_ids = i * tm + lax.broadcasted_iota(jnp.int32, (tm, cw), 0)
            row_mask = row_ids < M

        # Stream one lane-chunk at a time: live state is a couple of (tm, cw)
        # vreg groups, never a full (tm, tn) f32 temporary.
        for b in range(n_chunks):
            xb = x_ref[:, pl.ds(b * cw, cw)].astype(jnp.float32)
            tb = t_ref[:, pl.ds(b * cw, cw)].astype(jnp.float32)
            d = xb - tb
            if need_col_mask or need_row_mask:
                if need_col_mask:
                    col_ids = (j * tn + b * cw
                               + lax.broadcasted_iota(jnp.int32, (tm, cw), 1))
                    mask = col_ids < L
                    if need_row_mask:
                        mask = jnp.logical_and(mask, row_mask)
                else:
                    mask = row_mask
                d = jnp.where(mask, d, jnp.float32(0.0))
            p_ref[...] += d * d

    return kernel


def content_loss_forward(x_nchw, target_nchw):
    """Returns (passthrough_output, mse_loss_scalar)."""
    assert x_nchw.shape == target_nchw.shape
    assert x_nchw.dtype == target_nchw.dtype
    shape = x_nchw.shape

    total = 1
    for s in shape:
        total *= s
    if len(shape) >= 2:
        L = shape[-1] * shape[-2]     # lane axis: H*W for NCHW
    else:
        L = total
    M = total // L                    # sublane axis: N*C for NCHW

    x2 = x_nchw.reshape(M, L)
    t2 = target_nchw.reshape(M, L)

    itemsize = jnp.dtype(x2.dtype).itemsize
    # Dtype-aware minimum sublane tile (packed sublanes for sub-32-bit dtypes).
    min_sub = {4: 8, 2: 16, 1: 32}.get(itemsize, 8)
    TARGET_BYTES = 8 << 20            # ~8 MiB per input block (v7x/v6e sweet spot)

    # ---- row tile (tm) ----
    if M >= min_sub:
        tm_cap = _round_down(M, min_sub)
        tm = min(tm_cap, 512)
        # Megacore: make sure there are >= 2 "parallel" row steps when M allows.
        if pl.cdiv(M, tm) == 1 and tm >= 2 * min_sub:
            tm = _round_up(pl.cdiv(M, 2), min_sub)
    else:
        tm = M                        # full-extent block is always legal

    # ---- lane tile (tn) and chunk width (cw) ----
    if L >= 128:
        cw = 128
        Lp = _round_up(L, 128)
        tn_raw = max(128, TARGET_BYTES // max(1, tm * itemsize))
        tn = min(Lp, 32768, max(128, _round_down(tn_raw, 128)))
    else:
        cw = L                        # full-extent last dim block
        tn = L

    n_rows = pl.cdiv(M, tm)
    n_cols = pl.cdiv(L, tn)
    grid = (n_rows, n_cols)
    need_row_mask = (n_rows * tm != M)
    need_col_mask = (n_cols * tn != L)

    # ---- explicit VMEM budget (2 inputs x 2 pipeline buffers + resident
    # partial block, double-buffered, + headroom). Chunked accumulation means
    # no large hidden intermediates to account for. Clamp at 48 MiB (v7x-safe).
    tile_bytes = tm * tn * itemsize
    out_block_bytes = tm * cw * 4
    vmem_budget = 2 * 2 * tile_bytes + 2 * out_block_bytes + (2 << 20)
    vmem_budget = int(min(max(vmem_budget, 4 << 20), 48 << 20))

    kernel = _make_partial_kernel(tm, tn, cw, M, L, need_row_mask, need_col_mask)

    partials = pl.pallas_call(
        kernel,
        out_shape=jax.ShapeDtypeStruct((n_rows * tm, cw), jnp.float32),
        grid_spec=pltpu.PrefetchScalarGridSpec(
            num_scalar_prefetch=0,
            grid=grid,
            in_specs=[
                pl.BlockSpec((tm, tn), lambda i, j: (i, j)),
                pl.BlockSpec((tm, tn), lambda i, j: (i, j)),
            ],
            # Each row-tile owns its own (tm, cw) output block; that block is
            # revisited (accumulated) across the lane axis only.
            out_specs=pl.BlockSpec((tm, cw), lambda i, j: (i, 0)),
        ),
        compiler_params=pltpu.CompilerParams(
            dimension_semantics=("parallel", "arbitrary"),
            vmem_limit_bytes=vmem_budget,
        ),
    )(x2, t2)

    # Final collapse + mean in plain JAX (masked/padded rows are exactly zero).
    loss = jnp.sum(partials) / jnp.float32(total)

    # Passthrough: forward() returns the input unchanged -- no kernel copy.
    # TODO(synk): PyTorch stores the loss on `self.loss`; here it is returned.
    return x_nchw, loss


if __name__ == "__main__":
    # Small NCHW shapes consistent with a conv feature map.
    N, C, H, W = 2, 4, 16, 16
    key = jax.random.PRNGKey(0)
    k1, k2 = jax.random.split(key)
    x = jax.random.normal(k1, (N, C, H, W), dtype=jnp.float32)
    # "target" is a detached feature map captured at module construction time.
    target = jax.random.normal(k2, (N, C, H, W), dtype=jnp.float32)

    out, loss = content_loss_forward(x, target)
    out = jax.block_until_ready(out)
    loss = jax.block_until_ready(loss)

    # Reference check (plain JAX).
    ref_loss = jnp.mean((x - target) ** 2)
    assert jnp.allclose(out, x), "passthrough mismatch"
    assert jnp.allclose(loss, ref_loss, rtol=1e-6, atol=1e-6), (loss, ref_loss)

    print("KERNEL_OK")
</pallas_src>

<mosaic_0001>
module attributes {stable_mosaic.version = 11 : i64} {
  func.func @kernel(%arg0: i32, %arg1: i32, %arg2: memref<8x256xf32, #tpu.memory_space<vmem>>, %arg3: memref<8x256xf32, #tpu.memory_space<vmem>>, %arg4: memref<8x128xf32, #tpu.memory_space<vmem>>) attributes {dimension_semantics = [#tpu.dimension_semantics<parallel>, #tpu.dimension_semantics<arbitrary>], iteration_bounds = array<i64: 1, 1>, scalar_prefetch = 0 : i64, scratch_operands = 0 : i64, tpu.core_type = #tpu.core_type<tc>, window_params = [{transform_indices = @transform_0, window_bounds = array<i64: 8, 256>}, {transform_indices = @transform_1, window_bounds = array<i64: 8, 256>}, {transform_indices = @transform_2, window_bounds = array<i64: 8, 128>}]} {
    %c0_i32 = arith.constant 0 : i32
    %0 = arith.cmpi eq, %arg1, %c0_i32 : i32
    %1 = arith.extui %0 : i1 to i32
    %c0_i32_0 = arith.constant 0 : i32
    %2 = arith.cmpi ne, %1, %c0_i32_0 : i32
    scf.if %2 {
      %cst = arith.constant 0.000000e+00 : f32
      %17 = vector.broadcast %cst : f32 to vector<8x128xf32>
      %c0_15 = arith.constant 0 : index
      %c0_16 = arith.constant 0 : index
      %18 = vector.load %arg4[%c0_15, %c0_16] : memref<8x128xf32, #tpu.memory_space<vmem>>, vector<8x128xf32>
      tpu.vector_store %arg4[%c0_15, %c0_16], %17 {strides = array<i32>} : memref<8x128xf32, #tpu.memory_space<vmem>>, vector<8x128xf32>,
    } else {
    }
    %c0 = arith.constant 0 : index
    %c0_1 = arith.constant 0 : index
    %3 = vector.load %arg2[%c0, %c0_1] : memref<8x256xf32, #tpu.memory_space<vmem>>, vector<8x128xf32>
    %c0_2 = arith.constant 0 : index
    %c0_3 = arith.constant 0 : index
    %4 = vector.load %arg3[%c0_2, %c0_3] : memref<8x256xf32, #tpu.memory_space<vmem>>, vector<8x128xf32>
    %5 = arith.subf %3, %4 : vector<8x128xf32>
    %c0_4 = arith.constant 0 : index
    %c0_5 = arith.constant 0 : index
    %6 = vector.load %arg4[%c0_4, %c0_5] : memref<8x128xf32, #tpu.memory_space<vmem>>, vector<8x128xf32>
    %7 = arith.mulf %5, %5 : vector<8x128xf32>
    %8 = arith.addf %6, %7 : vector<8x128xf32>
    %c0_6 = arith.constant 0 : index
    %c0_7 = arith.constant 0 : index
    %9 = vector.load %arg4[%c0_6, %c0_7] : memref<8x128xf32, #tpu.memory_space<vmem>>, vector<8x128xf32>
    tpu.vector_store %arg4[%c0_6, %c0_7], %8 {strides = array<i32>} : memref<8x128xf32, #tpu.memory_space<vmem>>, vector<8x128xf32>,
    %c0_8 = arith.constant 0 : index
    %c128 = arith.constant 128 : index
    %10 = vector.load %arg2[%c0_8, %c128] : memref<8x256xf32, #tpu.memory_space<vmem>>, vector<8x128xf32>
    %c0_9 = arith.constant 0 : index
    %c128_10 = arith.constant 128 : index
    %11 = vector.load %arg3[%c0_9, %c128_10] : memref<8x256xf32, #tpu.memory_space<vmem>>, vector<8x128xf32>
    %12 = arith.subf %10, %11 : vector<8x128xf32>
    %c0_11 = arith.constant 0 : index
    %c0_12 = arith.constant 0 : index
    %13 = vector.load %arg4[%c0_11, %c0_12] : memref<8x128xf32, #tpu.memory_space<vmem>>, vector<8x128xf32>
    %14 = arith.mulf %12, %12 : vector<8x128xf32>
    %15 = arith.addf %13, %14 : vector<8x128xf32>
    %c0_13 = arith.constant 0 : index
    %c0_14 = arith.constant 0 : index
    %16 = vector.load %arg4[%c0_13, %c0_14] : memref<8x128xf32, #tpu.memory_space<vmem>>, vector<8x128xf32>
    tpu.vector_store %arg4[%c0_13, %c0_14], %15 {strides = array<i32>} : memref<8x128xf32, #tpu.memory_space<vmem>>, vector<8x128xf32>,
    return
  }
  func.func @transform_0(%arg0: i32, %arg1: i32) -> (i32, i32) {
    %c0_i32 = arith.constant 0 : i32
    return %arg0, %arg1 : i32, i32
  }
  func.func @transform_1(%arg0: i32, %arg1: i32) -> (i32, i32) {
    %c0_i32 = arith.constant 0 : i32
    return %arg0, %arg1 : i32, i32
  }
  func.func @transform_2(%arg0: i32, %arg1: i32) -> (i32, i32) {
    %c0_i32 = arith.constant 0 : i32
    %c0_i32_0 = arith.constant 0 : i32
    return %arg0, %c0_i32 : i32, i32
  }
}

</mosaic_0001>

<llo_original>
// kernel: tpu_custom_call.1
$region0: #{tpu_custom_call.1}
  #allocation0 [shape = 'u32[]', space=smem, size = 0x4, offset = 0x4, fixed_abs, tag = 'smem constant byte address 0x4 - core index']
  #allocation1 [shape = 'u32[144,128]{1,0:T(1,128)}', space=vmem, size = 0x12000, scoped, tag = 'internal scratch']
  %s0 = inlined_call_operand.hbm [shape: f32[8,256], index: 0, kind: input, shape index: {}]
  %s1 = inlined_call_operand.hbm [shape: f32[8,256], index: 1, kind: input, shape index: {}]
  %s2 = inlined_call_operand.hbm [shape: f32[8,128], index: 2, kind: output, shape index: {}]
  %s3 = sld [smem:[#allocation0]]
  $region30: #{tpu_custom_call.1} parent=0
    _
  %s5 = ssub.s32 1, %s3
  %s6 = scalar_select 0, %s5, %s3
  $region1: #{tpu_custom_call.1} parent=0
    #allocation2 [shape = 'u8[8192]{0}', space=vmem, size = 0x2000, scoped, tag = 'input window, operand 0, single buffered']
    #allocation3 [shape = 's32[1]{0}', space=sflag, size = 0x4, scoped, tag = 'scoped memory for tpu_custom_call.1']
    #allocation4 [shape = 's32[1]{0}', space=sflag, size = 0x4, scoped, tag = 'scoped memory for tpu_custom_call.1']
    #allocation5 [shape = 'u8[8192]{0}', space=vmem, size = 0x2000, scoped, tag = 'input window, operand 1, single buffered']
    #allocation6 [shape = 's32[1]{0}', space=sflag, size = 0x4, scoped, tag = 'scoped memory for tpu_custom_call.1']
    #allocation7 [shape = 'u8[4096]{0}', space=vmem, size = 0x1000, scoped, tag = 'output window, operand 0, single buffered']
    %7 = vsyncpa [#allocation3], 0
    %8 = vsyncpa [#allocation6], 0
    %9 = vsyncpa [#allocation4], 0
    // Predicated region
    $region2: #{tpu_custom_call.1} parent=1 // pred_check
      _
    $region3: #{tpu_custom_call.1} parent=1 // pred_check_branch
      %11 = sbr.rel (0) target = $region5
    $region4: #{tpu_custom_call.1} parent=1 // pred_region
      %s13 = ssub.s32 256, 256
      %14 = vsyncadd [#allocation3], %s13
      %s16 = sshll.u32 [#allocation2], 4
      %s17 = int_to_ptr.vmem [resolvable:$true] %s16
      %19 = dma.hbm_to_vmem [thread:$0]  %s0, 256, %s17, [#allocation3]
    $region5: #{tpu_custom_call.1} parent=1 // pred_fallthru
      _
    // Predicated region
    $region6: #{tpu_custom_call.1} parent=1 // pred_check
      _
    $region7: #{tpu_custom_call.1} parent=1 // pred_check_branch
      %21 = sbr.rel (0) target = $region9
    $region8: #{tpu_custom_call.1} parent=1 // pred_region
      %s23 = ssub.s32 256, 256
      %24 = vsyncadd [#allocation6], %s23
      %s26 = sshll.u32 [#allocation5], 4
      %s27 = int_to_ptr.vmem [resolvable:$true] %s26
      %29 = dma.hbm_to_vmem [thread:$0]  %s1, 256, %s27, [#allocation6]
    $region9: #{tpu_custom_call.1} parent=1 // pred_fallthru
      _
    // Predicated region
    $region10: #{tpu_custom_call.1} parent=1 // pred_check
      _
    $region11: #{tpu_custom_call.1} parent=1 // pred_check_branch
      %31 = sbr.rel (0) target = $region13
    $region12: #{tpu_custom_call.1} parent=1 // pred_region
      %32 = dma.done [#allocation3], 256
    $region13: #{tpu_custom_call.1} parent=1 // pred_fallthru
      _
    // Predicated region
    $region14: #{tpu_custom_call.1} parent=1 // pred_check
      _
    $region15: #{tpu_custom_call.1} parent=1 // pred_check_branch
      %34 = sbr.rel (0) target = $region17
    $region16: #{tpu_custom_call.1} parent=1 // pred_region
      %35 = dma.done [#allocation6], 256
    $region17: #{tpu_custom_call.1} parent=1 // pred_fallthru
      _
    %p36 = scmp.eq.s32.totalorder 0, 0
    // Predicated region
    $region18: #{tpu_custom_call.1} parent=1 // pred_check
      %p37 = pneg %p36
    $region19: #{tpu_custom_call.1} parent=1 // pred_check_branch
      %39 = sbr.rel (%p37) target = $region21
    $region20: #{tpu_custom_call.1} parent=1 // pred_region
      %40 = vst [vmem:[#allocation7] sm:$0xff] 0.0
    $region21: #{tpu_custom_call.1} parent=1 // pred_fallthru
      _
    %v41 = vld [vmem:[#allocation2] sm:$0xff]
    %v42 = vld [vmem:[#allocation5] sm:$0xff]
    %v43 = vsub.f32 %v41, %v42
    %v44 = vld [vmem:[#allocation7] sm:$0xff]
    %v45 = vmul.f32 %v43, %v43
    %v46 = vadd.f32 %v44, %v45
    %47 = vst [vmem:[#allocation7] sm:$0xff] %v46
    %v48 = vld [vmem:[#allocation2 + $0x8] sm:$0xff]
    %v49 = vld [vmem:[#allocation5 + $0x8] sm:$0xff]
    %v50 = vsub.f32 %v48, %v49
    %v51 = vld [vmem:[#allocation7] sm:$0xff]
    %v52 = vmul.f32 %v50, %v50
    %v53 = vadd.f32 %v51, %v52
    %54 = vst [vmem:[#allocation7] sm:$0xff] %v53
    // Predicated region
    $region22: #{tpu_custom_call.1} parent=1 // pred_check
      _
    $region23: #{tpu_custom_call.1} parent=1 // pred_check_branch
      %56 = sbr.rel (0) target = $region25
    $region24: #{tpu_custom_call.1} parent=1 // pred_region
      %s58 = ssub.s32 128, 128
      %59 = vsyncadd [#allocation4], %s58
      %s61 = sshll.u32 [#allocation7], 4
      %s62 = int_to_ptr.vmem [resolvable:$true] %s61
      %64 = dma.vmem_to_hbm [thread:$0]  %s62, 128, %s2, [#allocation4]
    $region25: #{tpu_custom_call.1} parent=1 // pred_fallthru
      _
    // Predicated region
    $region26: #{tpu_custom_call.1} parent=1 // pred_check
      _
    $region27: #{tpu_custom_call.1} parent=1 // pred_check_branch
      %66 = sbr.rel (0) target = $region29
    $region28: #{tpu_custom_call.1} parent=1 // pred_region
      %67 = dma.done [#allocation4], 128
    $region29: #{tpu_custom_call.1} parent=1 // pred_fallthru
      _
    %68 = vsyncpa [#allocation3], 1
    %69 = vsyncpa [#allocation6], 1
    %70 = vsyncpa [#allocation4], 1

</llo_original>
